<compile_context>
chip_gen: v5e
topology: v5e:2x2
jax: 0.10.0
libtpu: 0.0.40
codegen_flags: <defaults>
</compile_context>

<pallas_src>
import jax
import jax.numpy as jnp
from jax import lax
from jax.experimental import pallas as pl
from jax.experimental.pallas import tpu as pltpu


# x:(B, IN) . w:(OUT, IN) contracted on IN (dim 1 of both) -> (B, OUT).
_CONTRACT_ON_IN = (((1,), (1,)), ((), ()))

# Whole-operand-in-VMEM fast path only while total footprint stays well under
# the scoped VMEM budget on every generation (v7x: 32 MiB scoped / 64 MiB phys).
_SMALL_PATH_BYTES = 16 * 1024 * 1024


def _linear_kernel(x_ref, w_ref, b_ref, o_ref):
    # x_ref: (Bt, IN)  w_ref: (OUTt, IN)  b_ref: (1, OUTt)  o_ref: (Bt, OUTt)
    acc = lax.dot_general(
        x_ref[...],
        w_ref[...],
        dimension_numbers=_CONTRACT_ON_IN,
        preferred_element_type=jnp.float32,
    )
    o_ref[...] = (acc + b_ref[...].astype(jnp.float32)).astype(o_ref.dtype)


def _cost_estimate(B, IN, OUT, itemsize):
    return pl.CostEstimate(
        flops=2 * B * IN * OUT,
        transcendentals=0,
        bytes_accessed=(B * IN + OUT * IN + OUT + B * OUT) * itemsize,
    )


def _linear_small(x2d, weight, b2d):
    """All operands resident in VMEM, single kernel invocation (no grid)."""
    B, IN = x2d.shape
    OUT = weight.shape[0]
    return pl.pallas_call(
        _linear_kernel,
        out_shape=jax.ShapeDtypeStruct((B, OUT), x2d.dtype),
        in_specs=[pl.BlockSpec(memory_space=pltpu.MemorySpace.VMEM)] * 3,
        out_specs=pl.BlockSpec(memory_space=pltpu.MemorySpace.VMEM),
        cost_estimate=_cost_estimate(B, IN, OUT, x2d.dtype.itemsize),
    )(x2d, weight, b2d)


def _linear_tiled(x2d, weight, b2d):
    """Tiled (batch, OUT) grid for shapes too large to keep whole in VMEM."""
    B, IN = x2d.shape
    OUT = weight.shape[0]

    # Row tile: full batch if modest, else 256 MXU rows per pass.
    tm = B if B <= 256 else 256
    # Output tile: lane-dense (multiple of 128) or full OUT when it already fits.
    tn = OUT if OUT <= 512 else 512

    grid = (pl.cdiv(B, tm), pl.cdiv(OUT, tn))
    return pl.pallas_call(
        _linear_kernel,
        out_shape=jax.ShapeDtypeStruct((B, OUT), x2d.dtype),
        grid=grid,
        in_specs=[
            pl.BlockSpec((tm, IN), lambda i, j: (i, 0)),   # activations
            pl.BlockSpec((tn, IN), lambda i, j: (j, 0)),   # weight rows (torch layout)
            pl.BlockSpec((1, tn), lambda i, j: (0, j)),    # bias slice
        ],
        out_specs=pl.BlockSpec((tm, tn), lambda i, j: (i, j)),
        compiler_params=pltpu.CompilerParams(
            dimension_semantics=("parallel", "parallel"),
        ),
        cost_estimate=_cost_estimate(B, IN, OUT, x2d.dtype.itemsize),
    )(x2d, weight, b2d)


def mlp_speaker_embedding(x, weight, bias):
    """Equivalent of nn.Linear(hidden_size_2, hidden_size_3)(x), i.e. x @ W.T + b.

    x:      (..., IN)  float32  — any leading batch/time axes are folded together.
    weight: (OUT, IN)  float32  (PyTorch convention, NOT pre-transposed)
    bias:   (OUT,)     float32
    returns (..., OUT)
    """
    IN = x.shape[-1]
    OUT, IN_w = weight.shape
    assert IN == IN_w, f"feature mismatch: x has {IN}, weight expects {IN_w}"

    lead = x.shape[:-1]
    x2d = x.reshape(-1, IN)           # fold leading axes -> more MXU rows per pass
    B = x2d.shape[0]
    b2d = bias.reshape(1, OUT)        # 2D bias for TPU layout friendliness

    itemsize = x2d.dtype.itemsize
    total_bytes = (B * IN + OUT * IN + OUT + B * OUT) * itemsize
    if total_bytes <= _SMALL_PATH_BYTES:
        out2d = _linear_small(x2d, weight, b2d)
    else:
        out2d = _linear_tiled(x2d, weight, b2d)

    return out2d.reshape(*lead, OUT)


if __name__ == "__main__":
    hidden_size_2 = 256   # in_features  (module default)
    hidden_size_3 = 256   # out_features (module default)
    batch, time = 2, 4    # small leading axes, folded inside the wrapper

    key = jax.random.PRNGKey(0)
    kx, kw, kb = jax.random.split(key, 3)

    # Deterministic parameter init (mimics nn.Linear's uniform(-1/sqrt(in), 1/sqrt(in))).
    bound = 1.0 / jnp.sqrt(jnp.float32(hidden_size_2))
    weight = jax.random.uniform(
        kw, (hidden_size_3, hidden_size_2), jnp.float32, -bound, bound
    )
    bias = jax.random.uniform(kb, (hidden_size_3,), jnp.float32, -bound, bound)

    x = jax.random.normal(kx, (batch, time, hidden_size_2), jnp.float32)

    fwd = jax.jit(mlp_speaker_embedding)
    out = jax.block_until_ready(fwd(x, weight, bias))

    # Correctness check against plain JAX reference of torch semantics.
    ref = x @ weight.T + bias
    assert out.shape == (batch, time, hidden_size_3)
    assert jnp.allclose(out, ref, atol=1e-5, rtol=1e-5)

    print("KERNEL_OK")
</pallas_src>

<mosaic_0001>
module attributes {stable_mosaic.version = 11 : i64} {
  func.func @_linear_kernel(%arg0: memref<8x256xf32, #tpu.memory_space<vmem>>, %arg1: memref<256x256xf32, #tpu.memory_space<vmem>>, %arg2: memref<1x256xf32, #tpu.memory_space<vmem>>, %arg3: memref<8x256xf32, #tpu.memory_space<vmem>>) attributes {dimension_semantics = [], scalar_prefetch = 0 : i64, scratch_operands = 0 : i64, tpu.core_type = #tpu.core_type<tc>} {
    %c0 = arith.constant 0 : index
    %c0_0 = arith.constant 0 : index
    %0 = vector.load %arg0[%c0, %c0_0] : memref<8x256xf32, #tpu.memory_space<vmem>>, vector<8x256xf32>
    %c0_1 = arith.constant 0 : index
    %c0_2 = arith.constant 0 : index
    %1 = vector.load %arg1[%c0_1, %c0_2] : memref<256x256xf32, #tpu.memory_space<vmem>>, vector<256x256xf32>
    %cst = arith.constant dense<0.000000e+00> : vector<8x256xf32>
    %2 = tpu.matmul %0, %1, %cst {dimension_numbers = #tpu.dot_dimension_numbers<[1], [1], [0], [0], [0, 0, 1, 0], [], []>} : vector<8x256xf32>, vector<256x256xf32>, vector<8x256xf32> -> vector<8x256xf32>
    %c0_3 = arith.constant 0 : index
    %c0_4 = arith.constant 0 : index
    %3 = vector.load %arg2[%c0_3, %c0_4] : memref<1x256xf32, #tpu.memory_space<vmem>>, vector<1x256xf32>
    %4 = vector.broadcast %3 : vector<1x256xf32> to vector<8x256xf32>
    %5 = arith.addf %2, %4 : vector<8x256xf32>
    %c0_5 = arith.constant 0 : index
    %c0_6 = arith.constant 0 : index
    %6 = vector.load %arg3[%c0_5, %c0_6] : memref<8x256xf32, #tpu.memory_space<vmem>>, vector<8x256xf32>
    tpu.vector_store %arg3[%c0_5, %c0_6], %5 {strides = array<i32>} : memref<8x256xf32, #tpu.memory_space<vmem>>, vector<8x256xf32>,
    return
  }
}

</mosaic_0001>

<llo_original>
// kernel: mlp_speaker_embedding.1
$region0: #{mlp_speaker_embedding.1}
  #allocation0 [shape = 'u32[]', space=smem, size = 0x4, offset = 0x4, fixed_abs, tag = 'smem constant byte address 0x4 - core index']
  #allocation1 [shape = 'u32[72,128]{1,0:T(1,128)}', space=vmem, size = 0x9000, scoped, tag = 'internal scratch']
  %s0 = inlined_call_operand.vmem [shape: f32[8,256], index: 0, kind: input, shape index: {}]
  %s1 = inlined_call_operand.hbm [shape: f32[256,256], index: 1, kind: input, shape index: {}]
  %s2 = inlined_call_operand.vmem [shape: f32[1,256], index: 2, kind: input, shape index: {}]
  %s3 = inlined_call_operand.vmem [shape: f32[8,256], index: 3, kind: output, shape index: {}]
  %s4 = sld [smem:[#allocation0]]
  $region26: #{mlp_speaker_embedding.1} parent=0
    _
  %s6 = ssub.s32 1, %s4
  %s7 = scalar_select 0, %s6, %s4
  $region1: #{mlp_speaker_embedding.1} parent=0
    #allocation2 [shape = 'u8[262144]{0}', space=vmem, size = 0x40000, scoped, tag = 'input window, operand 1, single buffered']
    #allocation3 [shape = 's32[1]{0}', space=sflag, size = 0x4, scoped, tag = 'scoped memory for mlp_speaker_embedding.1']
    %8 = vsyncpa [#allocation3], 0
    // Predicated region
    $region2: #{mlp_speaker_embedding.1} parent=1 // pred_check
      _
    $region3: #{mlp_speaker_embedding.1} parent=1 // pred_check_branch
      %10 = sbr.rel (0) target = $region5
    $region4: #{mlp_speaker_embedding.1} parent=1 // pred_region
      _
    $region5: #{mlp_speaker_embedding.1} parent=1 // pred_fallthru
      _
    // Predicated region
    $region6: #{mlp_speaker_embedding.1} parent=1 // pred_check
      _
    $region7: #{mlp_speaker_embedding.1} parent=1 // pred_check_branch
      %12 = sbr.rel (0) target = $region9
    $region8: #{mlp_speaker_embedding.1} parent=1 // pred_region
      %14 = vsyncadd [#allocation3], 0
      %s15 = sshll.u32 %s1, 4
      %s16 = int_to_ptr.hbm [resolvable:$true] %s15
      %s17 = sshll.u32 [#allocation2], 4
      %s18 = int_to_ptr.vmem [resolvable:$true] %s17
      %23 = dma.hbm_to_vmem [thread:$0]  %s16, 8192, %s18, [#allocation3], 256, 256, 16
    $region9: #{mlp_speaker_embedding.1} parent=1 // pred_fallthru
      _
    // Predicated region
    $region10: #{mlp_speaker_embedding.1} parent=1 // pred_check
      _
    $region11: #{mlp_speaker_embedding.1} parent=1 // pred_check_branch
      %25 = sbr.rel (0) target = $region13
    $region12: #{mlp_speaker_embedding.1} parent=1 // pred_region
      _
    $region13: #{mlp_speaker_embedding.1} parent=1 // pred_fallthru
      _
    // Predicated region
    $region14: #{mlp_speaker_embedding.1} parent=1 // pred_check
      _
    $region15: #{mlp_speaker_embedding.1} parent=1 // pred_check_branch
      %27 = sbr.rel (0) target = $region17
    $region16: #{mlp_speaker_embedding.1} parent=1 // pred_region
      %29 = dma.done [#allocation3], 8192
    $region17: #{mlp_speaker_embedding.1} parent=1 // pred_fallthru
      _
    %v30 = vld [vmem:[%s0] sm:$0xff]
    %v31 = vld [vmem:[%s0 + $0x8] sm:$0xff]
    %v32 = vld [vmem:[#allocation2] sm:$0xff]
    %v33 = vld [vmem:[#allocation2 + $0x8] sm:$0xff]
    %v34 = vld [vmem:[#allocation2 + $0x10] sm:$0xff]
    %v35 = vld [vmem:[#allocation2 + $0x18] sm:$0xff]
    %v36 = vld [vmem:[#allocation2 + $0x20] sm:$0xff]
    %v37 = vld [vmem:[#allocation2 + $0x28] sm:$0xff]
    %v38 = vld [vmem:[#allocation2 + $0x30] sm:$0xff]
    %v39 = vld [vmem:[#allocation2 + $0x38] sm:$0xff]
    %v40 = vld [vmem:[#allocation2 + $0x40] sm:$0xff]
    %v41 = vld [vmem:[#allocation2 + $0x48] sm:$0xff]
    %v42 = vld [vmem:[#allocation2 + $0x50] sm:$0xff]
    %v43 = vld [vmem:[#allocation2 + $0x58] sm:$0xff]
    %v44 = vld [vmem:[#allocation2 + $0x60] sm:$0xff]
    %v45 = vld [vmem:[#allocation2 + $0x68] sm:$0xff]
    %v46 = vld [vmem:[#allocation2 + $0x70] sm:$0xff]
    %v47 = vld [vmem:[#allocation2 + $0x78] sm:$0xff]
    %v48 = vld [vmem:[#allocation2 + $0x80] sm:$0xff]
    %v49 = vld [vmem:[#allocation2 + $0x88] sm:$0xff]
    %v50 = vld [vmem:[#allocation2 + $0x90] sm:$0xff]
    %v51 = vld [vmem:[#allocation2 + $0x98] sm:$0xff]
    %v52 = vld [vmem:[#allocation2 + $0xa0] sm:$0xff]
    %v53 = vld [vmem:[#allocation2 + $0xa8] sm:$0xff]
    %v54 = vld [vmem:[#allocation2 + $0xb0] sm:$0xff]
    %v55 = vld [vmem:[#allocation2 + $0xb8] sm:$0xff]
    %v56 = vld [vmem:[#allocation2 + $0xc0] sm:$0xff]
    %v57 = vld [vmem:[#allocation2 + $0xc8] sm:$0xff]
    %v58 = vld [vmem:[#allocation2 + $0xd0] sm:$0xff]
    %v59 = vld [vmem:[#allocation2 + $0xd8] sm:$0xff]
    %v60 = vld [vmem:[#allocation2 + $0xe0] sm:$0xff]
    %v61 = vld [vmem:[#allocation2 + $0xe8] sm:$0xff]
    %v62 = vld [vmem:[#allocation2 + $0xf0] sm:$0xff]
    %v63 = vld [vmem:[#allocation2 + $0xf8] sm:$0xff]
    %v64 = vld [vmem:[#allocation2 + $0x100] sm:$0xff]
    %v65 = vld [vmem:[#allocation2 + $0x108] sm:$0xff]
    %v66 = vld [vmem:[#allocation2 + $0x110] sm:$0xff]
    %v67 = vld [vmem:[#allocation2 + $0x118] sm:$0xff]
    %v68 = vld [vmem:[#allocation2 + $0x120] sm:$0xff]
    %v69 = vld [vmem:[#allocation2 + $0x128] sm:$0xff]
    %v70 = vld [vmem:[#allocation2 + $0x130] sm:$0xff]
    %v71 = vld [vmem:[#allocation2 + $0x138] sm:$0xff]
    %v72 = vld [vmem:[#allocation2 + $0x140] sm:$0xff]
    %v73 = vld [vmem:[#allocation2 + $0x148] sm:$0xff]
    %v74 = vld [vmem:[#allocation2 + $0x150] sm:$0xff]
    %v75 = vld [vmem:[#allocation2 + $0x158] sm:$0xff]
    %v76 = vld [vmem:[#allocation2 + $0x160] sm:$0xff]
    %v77 = vld [vmem:[#allocation2 + $0x168] sm:$0xff]
    %v78 = vld [vmem:[#allocation2 + $0x170] sm:$0xff]
    %v79 = vld [vmem:[#allocation2 + $0x178] sm:$0xff]
    %v80 = vld [vmem:[#allocation2 + $0x180] sm:$0xff]
    %v81 = vld [vmem:[#allocation2 + $0x188] sm:$0xff]
    %v82 = vld [vmem:[#allocation2 + $0x190] sm:$0xff]
    %v83 = vld [vmem:[#allocation2 + $0x198] sm:$0xff]
    %v84 = vld [vmem:[#allocation2 + $0x1a0] sm:$0xff]
    %v85 = vld [vmem:[#allocation2 + $0x1a8] sm:$0xff]
    %v86 = vld [vmem:[#allocation2 + $0x1b0] sm:$0xff]
    %v87 = vld [vmem:[#allocation2 + $0x1b8] sm:$0xff]
    %v88 = vld [vmem:[#allocation2 + $0x1c0] sm:$0xff]
    %v89 = vld [vmem:[#allocation2 + $0x1c8] sm:$0xff]
    %v90 = vld [vmem:[#allocation2 + $0x1d0] sm:$0xff]
    %v91 = vld [vmem:[#allocation2 + $0x1d8] sm:$0xff]
    %v92 = vld [vmem:[#allocation2 + $0x1e0] sm:$0xff]
    %v93 = vld [vmem:[#allocation2 + $0x1e8] sm:$0xff]
    %v94 = vld [vmem:[#allocation2 + $0x1f0] sm:$0xff]
    %v95 = vld [vmem:[#allocation2 + $0x1f8] sm:$0xff]
    %v96 = vld [vmem:[%s2] sm:$0x3]
    %v98 = vperm.slane %v96, 0
    %v99 = vperm.slane %v96, 1
    %102 = vmatpush.xpose.msra.mxu0 %v62
    %103 = vmatpush.xpose.msra.mxu0 %v60
    %104 = vmatpush.xpose.msra.mxu0 %v58
    %105 = vmatpush.xpose.msra.mxu0 %v56
    %106 = vmatpush.xpose.msra.mxu0 %v54
    %107 = vmatpush.xpose.msra.mxu0 %v52
    %108 = vmatpush.xpose.msra.mxu0 %v50
    %109 = vmatpush.xpose.msra.mxu0 %v48
    %110 = vmatpush.xpose.msra.mxu0 %v46
    %111 = vmatpush.xpose.msra.mxu0 %v44
    %112 = vmatpush.xpose.msra.mxu0 %v42
    %113 = vmatpush.xpose.msra.mxu0 %v40
    %114 = vmatpush.xpose.msra.mxu0 %v38
    %115 = vmatpush.xpose.msra.mxu0 %v36
    %116 = vmatpush.xpose.msra.mxu0 %v34
    %117 = vmatpush.xpose.msra.mxu0 %v32
    %118 = vmatmul.f32.gmra.mxu0 %v30
    %v119 = vpop.f32.mrf.mxu0
    %v120 = vadd.f32 %v98, %v119
    %121 = vdwg.mxu0
    %122 = vmatpush.xpose.msra.mxu0 %v63
    %123 = vmatpush.xpose.msra.mxu0 %v61
    %124 = vmatpush.xpose.msra.mxu0 %v59
    %125 = vmatpush.xpose.msra.mxu0 %v57
    %126 = vmatpush.xpose.msra.mxu0 %v55
    %127 = vmatpush.xpose.msra.mxu0 %v53
    %128 = vmatpush.xpose.msra.mxu0 %v51
    %129 = vmatpush.xpose.msra.mxu0 %v49
    %130 = vmatpush.xpose.msra.mxu0 %v47
    %131 = vmatpush.xpose.msra.mxu0 %v45
    %132 = vmatpush.xpose.msra.mxu0 %v43
    %133 = vmatpush.xpose.msra.mxu0 %v41
    %134 = vmatpush.xpose.msra.mxu0 %v39
    %135 = vmatpush.xpose.msra.mxu0 %v37
    %136 = vmatpush.xpose.msra.mxu0 %v35
    %137 = vmatpush.xpose.msra.mxu0 %v33
    %138 = vmatmul.f32.gmra.mxu0 %v31
    %v139 = vpop.f32.mrf.mxu0
    %v140 = vadd.f32 %v120, %v139
    %141 = vdwg.mxu0
    %142 = vmatpush.xpose.msra.mxu0 %v94
    %143 = vmatpush.xpose.msra.mxu0 %v92
    %144 = vmatpush.xpose.msra.mxu0 %v90
    %145 = vmatpush.xpose.msra.mxu0 %v88
    %146 = vmatpush.xpose.msra.mxu0 %v86
    %147 = vmatpush.xpose.msra.mxu0 %v84
    %148 = vmatpush.xpose.msra.mxu0 %v82
    %149 = vmatpush.xpose.msra.mxu0 %v80
    %150 = vmatpush.xpose.msra.mxu0 %v78
    %151 = vmatpush.xpose.msra.mxu0 %v76
    %152 = vmatpush.xpose.msra.mxu0 %v74
    %153 = vmatpush.xpose.msra.mxu0 %v72
    %154 = vmatpush.xpose.msra.mxu0 %v70
    %155 = vmatpush.xpose.msra.mxu0 %v68
    %156 = vmatpush.xpose.msra.mxu0 %v66
    %157 = vmatpush.xpose.msra.mxu0 %v64
    %158 = vmatmul.f32.gmra.mxu0 %v30
    %v159 = vpop.f32.mrf.mxu0
    %v160 = vadd.f32 %v99, %v159
    %161 = vdwg.mxu0
    %162 = vmatpush.xpose.msra.mxu0 %v95
    %163 = vmatpush.xpose.msra.mxu0 %v93
    %164 = vmatpush.xpose.msra.mxu0 %v91
    %165 = vmatpush.xpose.msra.mxu0 %v89
    %166 = vmatpush.xpose.msra.mxu0 %v87
    %167 = vmatpush.xpose.msra.mxu0 %v85
    %168 = vmatpush.xpose.msra.mxu0 %v83
    %169 = vmatpush.xpose.msra.mxu0 %v81
    %170 = vmatpush.xpose.msra.mxu0 %v79
    %171 = vmatpush.xpose.msra.mxu0 %v77
    %172 = vmatpush.xpose.msra.mxu0 %v75
    %173 = vmatpush.xpose.msra.mxu0 %v73
    %174 = vmatpush.xpose.msra.mxu0 %v71
    %175 = vmatpush.xpose.msra.mxu0 %v69
    %176 = vmatpush.xpose.msra.mxu0 %v67
    %177 = vmatpush.xpose.msra.mxu0 %v65
    %178 = vmatmul.f32.gmra.mxu0 %v31
    %v179 = vpop.f32.mrf.mxu0
    %v180 = vadd.f32 %v160, %v179
    %181 = vdwg.mxu0
    %182 = vst [vmem:[%s3] sm:$0xff] %v140
    %183 = vst [vmem:[%s3 + $0x8] sm:$0xff] %v180
    // Predicated region
    $region18: #{mlp_speaker_embedding.1} parent=1 // pred_check
      _
    $region19: #{mlp_speaker_embedding.1} parent=1 // pred_check_branch
      %185 = sbr.rel (0) target = $region21
    $region20: #{mlp_speaker_embedding.1} parent=1 // pred_region
      _
    $region21: #{mlp_speaker_embedding.1} parent=1 // pred_fallthru
      _
    // Predicated region
    $region22: #{mlp_speaker_embedding.1} parent=1 // pred_check
      _
    $region23: #{mlp_speaker_embedding.1} parent=1 // pred_check_branch
      %187 = sbr.rel (0) target = $region25
    $region24: #{mlp_speaker_embedding.1} parent=1 // pred_region
      _
    $region25: #{mlp_speaker_embedding.1} parent=1 // pred_fallthru
      _
    %188 = vsyncpa [#allocation3], 1

</llo_original>
